<compile_context>
chip_gen: v6e
topology: v6e:2x2x1
jax: 0.10.0
libtpu: 0.0.40
codegen_flags: <defaults>
</compile_context>

<pallas_src>
import jax
import jax.numpy as jnp
from jax.experimental import pallas as pl
from jax.experimental.pallas import tpu as pltpu

_LANE = 128   # f32 lane width
_SUB = 8      # f32 sublane width


def _round_up(x, m):
    return ((x + m - 1) // m) * m


def _mlp_kernel(x_ref, w1_ref, b1_ref, w2_ref, b2_ref, o_ref, h_ref):
    # First Dense: x @ W1 + b1, relu.  Intermediate lives in VMEM scratch so
    # large batch tiles do not spill vregs.
    h = jnp.dot(x_ref[...], w1_ref[...], preferred_element_type=jnp.float32)
    h_ref[...] = jnp.maximum(h + b1_ref[...], 0.0)     # b1 (1, HID_P) broadcasts
    # Second Dense: h @ W2 + b2
    y = jnp.dot(h_ref[...], w2_ref[...], preferred_element_type=jnp.float32)
    o_ref[...] = (y + b2_ref[...]).astype(o_ref.dtype)  # b2 (1, OUT_P)


def tf_module_forward(x, w1, b1, w2, b2, *, tile_b=512):
    """Fused 2-layer Dense MLP (the wrapped keras model's call) on TPU.

    x : (B, IN) f32, w1 : (IN, HIDDEN), b1 : (HIDDEN,),
    w2 : (HIDDEN, OUT), b2 : (OUT,)  ->  (B, OUT) f32
    """
    x = x.astype(jnp.float32)           # TFModule.cpu_eval_forward: force_float32
    B, IN = x.shape
    HIDDEN = w1.shape[1]
    OUT = w2.shape[1]

    # Lane-dense padding of the feature dims (biggest measured store/MXU lever).
    hid_p = _round_up(HIDDEN, _LANE)
    out_p = _round_up(OUT, _LANE)

    # Batch tile: multiple of 8 sublanes, capped by tile_b; pad B up to a
    # multiple of the tile so the grid divides evenly.
    tb = _round_up(min(tile_b, _round_up(B, _SUB)), _SUB)
    b_p = _round_up(B, tb)
    grid = (b_p // tb,)

    # Zero-padded operands (padded hidden cols -> relu(0+0)=0; padded w2 rows
    # are 0, so padding is exactly inert; padded output cols sliced off below).
    xp = jnp.zeros((b_p, IN), jnp.float32).at[:B, :].set(x)
    w1p = jnp.zeros((IN, hid_p), jnp.float32).at[:, :HIDDEN].set(w1.astype(jnp.float32))
    b1p = jnp.zeros((1, hid_p), jnp.float32).at[0, :HIDDEN].set(b1.astype(jnp.float32))
    w2p = jnp.zeros((hid_p, out_p), jnp.float32).at[:HIDDEN, :OUT].set(w2.astype(jnp.float32))
    b2p = jnp.zeros((1, out_p), jnp.float32).at[0, :OUT].set(b2.astype(jnp.float32))

    # VMEM budget (bytes): double-buffered x/out tiles + resident weights
    # (also double-buffered by the pipeline) + h scratch.  Sized with 2x
    # headroom, capped below the 64 MiB v7x physical VMEM.
    vmem_bytes = 4 * (
        2 * tb * (IN + out_p)
        + 2 * (IN * hid_p + hid_p * out_p + hid_p + out_p)
        + tb * hid_p
    )
    vmem_limit = int(min(max(2 * vmem_bytes, 8 << 20), 64 << 20))

    cost = pl.CostEstimate(
        flops=2 * b_p * (IN * hid_p + hid_p * out_p),
        transcendentals=0,
        bytes_accessed=4 * (b_p * IN + b_p * out_p
                            + IN * hid_p + hid_p * out_p + hid_p + out_p),
    )

    out_padded = pl.pallas_call(
        _mlp_kernel,
        out_shape=jax.ShapeDtypeStruct((b_p, out_p), jnp.float32),
        grid=grid,
        in_specs=[
            pl.BlockSpec((tb, IN), lambda i: (i, 0)),        # x tile, pipelined over B
            pl.BlockSpec((IN, hid_p), lambda i: (0, 0)),     # weights resident
            pl.BlockSpec((1, hid_p), lambda i: (0, 0)),
            pl.BlockSpec((hid_p, out_p), lambda i: (0, 0)),
            pl.BlockSpec((1, out_p), lambda i: (0, 0)),
        ],
        out_specs=pl.BlockSpec((tb, out_p), lambda i: (i, 0)),
        scratch_shapes=[pltpu.VMEM((tb, hid_p), jnp.float32)],
        compiler_params=pltpu.CompilerParams(
            dimension_semantics=("parallel",),
            vmem_limit_bytes=vmem_limit,
        ),
        cost_estimate=cost,
    )(xp, w1p, b1p, w2p, b2p)

    return out_padded[:B, :OUT]


if __name__ == "__main__":
    # Small shapes consistent with a tiny keras Dense stack; batch chosen so
    # the grid has >1 step (tile_b=128 -> grid=(2,)).
    B, IN, HIDDEN, OUT = 256, 32, 64, 32

    key = jax.random.PRNGKey(0)
    k_x, k_w1, k_b1, k_w2, k_b2 = jax.random.split(key, 5)

    # Deterministic synthetic parameters (glorot-ish scale), float32 as per
    # TFModule.cpu_eval_forward(force_float32=True).
    x = jax.random.normal(k_x, (B, IN), dtype=jnp.float32)
    w1 = jax.random.normal(k_w1, (IN, HIDDEN), dtype=jnp.float32) * (1.0 / jnp.sqrt(IN))
    b1 = jax.random.normal(k_b1, (HIDDEN,), dtype=jnp.float32) * 0.01
    w2 = jax.random.normal(k_w2, (HIDDEN, OUT), dtype=jnp.float32) * (1.0 / jnp.sqrt(HIDDEN))
    b2 = jax.random.normal(k_b2, (OUT,), dtype=jnp.float32) * 0.01

    out = tf_module_forward(x, w1, b1, w2, b2, tile_b=128)
    out = jax.block_until_ready(out)

    # Reference check in plain JAX (the semantics of the wrapped keras model).
    ref = jnp.maximum(x @ w1 + b1, 0.0) @ w2 + b2
    assert out.shape == (B, OUT)
    assert jnp.allclose(out, ref, atol=1e-5, rtol=1e-5)

    # TODO(synk): TFModule.backward / get_parameters / set_parameters are
    # framework plumbing (Parameter bookkeeping) with no Pallas equivalent;
    # only the forward hot path is implemented.
    print("KERNEL_OK")
</pallas_src>

<mosaic_0001>
module attributes {stable_mosaic.version = 11 : i64} {
  func.func @_mlp_kernel(%arg0: i32, %arg1: memref<128x32xf32, #tpu.memory_space<vmem>>, %arg2: memref<32x128xf32, #tpu.memory_space<vmem>>, %arg3: memref<1x128xf32, #tpu.memory_space<vmem>>, %arg4: memref<128x128xf32, #tpu.memory_space<vmem>>, %arg5: memref<1x128xf32, #tpu.memory_space<vmem>>, %arg6: memref<128x128xf32, #tpu.memory_space<vmem>>, %arg7: memref<128x128xf32, #tpu.memory_space<vmem>>) attributes {dimension_semantics = [#tpu.dimension_semantics<parallel>], iteration_bounds = array<i64: 2>, scalar_prefetch = 0 : i64, scratch_operands = 1 : i64, tpu.core_type = #tpu.core_type<tc>, window_params = [{transform_indices = @transform_0, window_bounds = array<i64: 128, 32>}, {pipeline_mode = #tpu.pipeline_mode<synchronous>, transform_indices = @transform_1, window_bounds = array<i64: 32, 128>}, {pipeline_mode = #tpu.pipeline_mode<synchronous>, transform_indices = @transform_2, window_bounds = array<i64: 1, 128>}, {pipeline_mode = #tpu.pipeline_mode<synchronous>, transform_indices = @transform_3, window_bounds = array<i64: 128, 128>}, {pipeline_mode = #tpu.pipeline_mode<synchronous>, transform_indices = @transform_4, window_bounds = array<i64: 1, 128>}, {transform_indices = @transform_5, window_bounds = array<i64: 128, 128>}]} {
    %c0 = arith.constant 0 : index
    %c0_0 = arith.constant 0 : index
    %0 = vector.load %arg1[%c0, %c0_0] : memref<128x32xf32, #tpu.memory_space<vmem>>, vector<128x32xf32>
    %c0_1 = arith.constant 0 : index
    %c0_2 = arith.constant 0 : index
    %1 = vector.load %arg2[%c0_1, %c0_2] : memref<32x128xf32, #tpu.memory_space<vmem>>, vector<32x128xf32>
    %cst = arith.constant dense<0.000000e+00> : vector<128x128xf32>
    %2 = tpu.matmul %0, %1, %cst {dimension_numbers = #tpu.dot_dimension_numbers<[1], [0], [0], [1], [0, 0, 1, 1], [], []>} : vector<128x32xf32>, vector<32x128xf32>, vector<128x128xf32> -> vector<128x128xf32>
    %c0_3 = arith.constant 0 : index
    %c0_4 = arith.constant 0 : index
    %3 = vector.load %arg3[%c0_3, %c0_4] : memref<1x128xf32, #tpu.memory_space<vmem>>, vector<1x128xf32>
    %4 = vector.broadcast %3 : vector<1x128xf32> to vector<128x128xf32>
    %5 = arith.addf %2, %4 : vector<128x128xf32>
    %cst_5 = arith.constant 0.000000e+00 : f32
    %6 = vector.broadcast %cst_5 : f32 to vector<128x128xf32>
    %7 = arith.maximumf %5, %6 : vector<128x128xf32>
    %c0_6 = arith.constant 0 : index
    %c0_7 = arith.constant 0 : index
    %8 = vector.load %arg7[%c0_6, %c0_7] : memref<128x128xf32, #tpu.memory_space<vmem>>, vector<128x128xf32>
    tpu.vector_store %arg7[%c0_6, %c0_7], %7 {strides = array<i32>} : memref<128x128xf32, #tpu.memory_space<vmem>>, vector<128x128xf32>,
    %c0_8 = arith.constant 0 : index
    %c0_9 = arith.constant 0 : index
    %9 = vector.load %arg7[%c0_8, %c0_9] : memref<128x128xf32, #tpu.memory_space<vmem>>, vector<128x128xf32>
    %c0_10 = arith.constant 0 : index
    %c0_11 = arith.constant 0 : index
    %10 = vector.load %arg4[%c0_10, %c0_11] : memref<128x128xf32, #tpu.memory_space<vmem>>, vector<128x128xf32>
    %cst_12 = arith.constant dense<0.000000e+00> : vector<128x128xf32>
    %11 = tpu.matmul %9, %10, %cst_12 {dimension_numbers = #tpu.dot_dimension_numbers<[1], [0], [0], [1], [0, 0, 1, 1], [], []>} : vector<128x128xf32>, vector<128x128xf32>, vector<128x128xf32> -> vector<128x128xf32>
    %c0_13 = arith.constant 0 : index
    %c0_14 = arith.constant 0 : index
    %12 = vector.load %arg5[%c0_13, %c0_14] : memref<1x128xf32, #tpu.memory_space<vmem>>, vector<1x128xf32>
    %13 = vector.broadcast %12 : vector<1x128xf32> to vector<128x128xf32>
    %14 = arith.addf %11, %13 : vector<128x128xf32>
    %c0_15 = arith.constant 0 : index
    %c0_16 = arith.constant 0 : index
    %15 = vector.load %arg6[%c0_15, %c0_16] : memref<128x128xf32, #tpu.memory_space<vmem>>, vector<128x128xf32>
    tpu.vector_store %arg6[%c0_15, %c0_16], %14 {strides = array<i32>} : memref<128x128xf32, #tpu.memory_space<vmem>>, vector<128x128xf32>,
    return
  }
  func.func @transform_0(%arg0: i32) -> (i32, i32) {
    %c0_i32 = arith.constant 0 : i32
    %c0_i32_0 = arith.constant 0 : i32
    return %arg0, %c0_i32 : i32, i32
  }
  func.func @transform_1(%arg0: i32) -> (i32, i32) {
    %c0_i32 = arith.constant 0 : i32
    %c0_i32_0 = arith.constant 0 : i32
    %c0_i32_1 = arith.constant 0 : i32
    return %c0_i32, %c0_i32_0 : i32, i32
  }
  func.func @transform_2(%arg0: i32) -> (i32, i32) {
    %c0_i32 = arith.constant 0 : i32
    %c0_i32_0 = arith.constant 0 : i32
    %c0_i32_1 = arith.constant 0 : i32
    return %c0_i32, %c0_i32_0 : i32, i32
  }
  func.func @transform_3(%arg0: i32) -> (i32, i32) {
    %c0_i32 = arith.constant 0 : i32
    %c0_i32_0 = arith.constant 0 : i32
    %c0_i32_1 = arith.constant 0 : i32
    return %c0_i32, %c0_i32_0 : i32, i32
  }
  func.func @transform_4(%arg0: i32) -> (i32, i32) {
    %c0_i32 = arith.constant 0 : i32
    %c0_i32_0 = arith.constant 0 : i32
    %c0_i32_1 = arith.constant 0 : i32
    return %c0_i32, %c0_i32_0 : i32, i32
  }
  func.func @transform_5(%arg0: i32) -> (i32, i32) {
    %c0_i32 = arith.constant 0 : i32
    %c0_i32_0 = arith.constant 0 : i32
    return %arg0, %c0_i32 : i32, i32
  }
}

</mosaic_0001>

<llo_original>
// kernel: tpu_custom_call.1
$region0: #{tpu_custom_call.1}
  #allocation0 [shape = 'u32[]', space=smem, size = 0x4, offset = 0x4, fixed_abs, tag = 'smem constant byte address 0x4 - core index']
  #allocation1 [shape = 'u32[144,128]{1,0:T(1,128)}', space=vmem, size = 0x12000, scoped, tag = 'internal scratch']
  #allocation2 [shape = 'f32[128,128]{1,0:T(8,128)}', space=vmem, size = 0x10000, scoped, tag = 'scratch operand']
  %s0 = inlined_call_operand.vmem [shape: f32[256,32], index: 0, kind: input, shape index: {}]
  %s1 = inlined_call_operand.vmem [shape: f32[32,128], index: 1, kind: input, shape index: {}]
  %s2 = inlined_call_operand.vmem [shape: f32[1,128], index: 2, kind: input, shape index: {}]
  %s3 = inlined_call_operand.vmem [shape: f32[128,128], index: 3, kind: input, shape index: {}]
  %s4 = inlined_call_operand.vmem [shape: f32[1,128], index: 4, kind: input, shape index: {}]
  %s5 = inlined_call_operand.hbm [shape: f32[256,128], index: 5, kind: output, shape index: {}]
  %s6 = sld [smem:[#allocation0]]
  $region53: #{tpu_custom_call.1} parent=0
    _
  %s8 = ssub.s32 1, %s6
  %s9 = scalar_select 0, %s8, %s6
  $region1: #{tpu_custom_call.1} parent=0
    #allocation3 [shape = 'u8[131072]{0}', space=vmem, size = 0x20000, scoped, tag = 'output window, operand 0']
    #allocation4 [shape = 's32[2]{0}', space=sflag, size = 0x8, scoped, tag = 'scoped memory for tpu_custom_call.1']
    %10 = vsyncpa [#allocation4], 0
    %s11 = scalar_lea.sflag [#allocation4], 1
    %12 = vsyncpa %s11, 0
    loop: start=0, step=1, limit=4
    $region2: #{tpu_custom_call.1} parent=1 // loop_pre_header
      _
    $region3: #{tpu_custom_call.1} parent=1 // loop_header
      %s14 = sphi 0, %s18
      %p15 = scmp.ge.s32.totalorder %s14, 4
      %s24 = sphi 0, %s26
      %s27 = sphi 0, %s24
      %s28 = sphi 0, %s27
      %s44 = sphi 0, %s28
      %s48 = sphi 0, %s48
      %s50 = sphi 0, %s48
      %s51 = sphi 0, %s50
      %s65 = sphi 0, %s51
      %s69 = sphi 0, %s69
      %s71 = sphi 0, %s69
      %s72 = sphi 0, %s71
      %s86 = sphi 0, %s72
      %s90 = sphi 0, %s90
      %s92 = sphi 0, %s90
      %s93 = sphi 0, %s92
      %s107 = sphi 0, %s93
      %s111 = sphi 0, %s111
      %s113 = sphi 0, %s111
      %s114 = sphi 0, %s113
      %s128 = sphi 0, %s114
      %s134 = sphi 0, %s136
      %s137 = sphi 0, %s134
      %s138 = sphi 0, %s137
      %s154 = sphi 0, %s138
    $region4: #{tpu_custom_call.1} parent=1 // loop_header_branch
      %17 = sbr.rel (%p15) target = $region8
    $region5: #{tpu_custom_call.1} parent=1 // loop_body
      %s19 = ssub.s32 %s14, 1
      %s20 = ssub.s32 %s14, 2
      %s21 = sadd.s32 %s14, 1
      %s22 = ssub.s32 %s14, %s21
      %p23 = scmp.eq.s32.totalorder %s22, 0
      %s25 = sadd.s32 %s24, 1
      %s26 = scalar_select %p23, %s24, %s25
      %p29 = pneg %p23
      %p30 = scmp.eq.s32.totalorder %s14, 1
      %p31 = por %p29, %p30
      %p32 = scmp.ne.s32.totalorder %s24, %s27
      %p33 = scmp.eq.s32.totalorder %s14, 0
      %p34 = por %p32, %p33
      %p35 = scmp.ne.s32.totalorder %s24, %s27
      %p36 = scmp.eq.s32.totalorder %s19, 1
      %p37 = por %p35, %p36
      %p38 = scmp.ne.s32.totalorder %s27, %s28
      %p39 = scmp.eq.s32.totalorder %s19, 0
      %p40 = por %p38, %p39
      %p41 = scmp.ne.s32.totalorder %s27, %s28
      %p42 = scmp.eq.s32.totalorder %s20, 1
      %p43 = por %p41, %p42
      %p45 = scmp.ne.s32.totalorder %s28, %s44
      %p46 = scmp.eq.s32.totalorder %s20, 0
      %p47 = por %p45, %p46
      %s49 = sadd.s32 %s48, 1
      %p52 = scmp.eq.s32.totalorder %s14, 1
      %p53 = scmp.ne.s32.totalorder %s48, %s50
      %p54 = scmp.eq.s32.totalorder %s14, 0
      %p55 = por %p53, %p54
      %p56 = scmp.ne.s32.totalorder %s48, %s50
      %p57 = scmp.eq.s32.totalorder %s19, 1
      %p58 = por %p56, %p57
      %p59 = scmp.ne.s32.totalorder %s50, %s51
      %p60 = scmp.eq.s32.totalorder %s19, 0
      %p61 = por %p59, %p60
      %p62 = scmp.ne.s32.totalorder %s50, %s51
      %p63 = scmp.eq.s32.totalorder %s20, 1
      %p64 = por %p62, %p63
      %p66 = scmp.ne.s32.totalorder %s51, %s65
      %p67 = scmp.eq.s32.totalorder %s20, 0
      %p68 = por %p66, %p67
      %s70 = sadd.s32 %s69, 1
      %p73 = scmp.eq.s32.totalorder %s14, 1
      %p74 = scmp.ne.s32.totalorder %s69, %s71
      %p75 = scmp.eq.s32.totalorder %s14, 0
      %p76 = por %p74, %p75
      %p77 = scmp.ne.s32.totalorder %s69, %s71
      %p78 = scmp.eq.s32.totalorder %s19, 1
      %p79 = por %p77, %p78
      %p80 = scmp.ne.s32.totalorder %s71, %s72
      %p81 = scmp.eq.s32.totalorder %s19, 0
      %p82 = por %p80, %p81
      %p83 = scmp.ne.s32.totalorder %s71, %s72
      %p84 = scmp.eq.s32.totalorder %s20, 1
      %p85 = por %p83, %p84
      %p87 = scmp.ne.s32.totalorder %s72, %s86
      %p88 = scmp.eq.s32.totalorder %s20, 0
      %p89 = por %p87, %p88
      %s91 = sadd.s32 %s90, 1
      %p94 = scmp.eq.s32.totalorder %s14, 1
      %p95 = scmp.ne.s32.totalorder %s90, %s92
      %p96 = scmp.eq.s32.totalorder %s14, 0
      %p97 = por %p95, %p96
      %p98 = scmp.ne.s32.totalorder %s90, %s92
      %p99 = scmp.eq.s32.totalorder %s19, 1
      %p100 = por %p98, %p99
      %p101 = scmp.ne.s32.totalorder %s92, %s93
      %p102 = scmp.eq.s32.totalorder %s19, 0
      %p103 = por %p101, %p102
      %p104 = scmp.ne.s32.totalorder %s92, %s93
      %p105 = scmp.eq.s32.totalorder %s20, 1
      %p106 = por %p104, %p105
      %p108 = scmp.ne.s32.totalorder %s93, %s107
      %p109 = scmp.eq.s32.totalorder %s20, 0
      %p110 = por %p108, %p109
      %s112 = sadd.s32 %s111, 1
      %p115 = scmp.eq.s32.totalorder %s14, 1
      %p116 = scmp.ne.s32.totalorder %s111, %s113
      %p117 = scmp.eq.s32.totalorder %s14, 0
      %p118 = por %p116, %p117
      %p119 = scmp.ne.s32.totalorder %s111, %s113
      %p120 = scmp.eq.s32.totalorder %s19, 1
      %p121 = por %p119, %p120
      %p122 = scmp.ne.s32.totalorder %s113, %s114
      %p123 = scmp.eq.s32.totalorder %s19, 0
      %p124 = por %p122, %p123
      %p125 = scmp.ne.s32.totalorder %s113, %s114
      %p126 = scmp.eq.s32.totalorder %s20, 1
      %p127 = por %p125, %p126
      %p129 = scmp.ne.s32.totalorder %s114, %s128
      %p130 = scmp.eq.s32.totalorder %s20, 0
      %p131 = por %p129, %p130
      %s132 = ssub.s32 %s14, %s21
      %p133 = scmp.eq.s32.totalorder %s132, 0
      %s135 = sadd.s32 %s134, 1
      %s136 = scalar_select %p133, %s134, %s135
      %p139 = pneg %p133
      %p140 = scmp.eq.s32.totalorder %s14, 1
      %p141 = por %p139, %p140
      %p142 = scmp.ne.s32.totalorder %s134, %s137
      %p143 = scmp.eq.s32.totalorder %s14, 0
      %p144 = por %p142, %p143
      %p145 = scmp.ne.s32.totalorder %s134, %s137
      %p146 = scmp.eq.s32.totalorder %s19, 1
      %p147 = por %p145, %p146
      %p148 = scmp.ne.s32.totalorder %s137, %s138
      %p149 = scmp.eq.s32.totalorder %s19, 0
      %p150 = por %p148, %p149
      %p151 = scmp.ne.s32.totalorder %s137, %s138
      %p152 = scmp.eq.s32.totalorder %s20, 1
      %p153 = por %p151, %p152
      %p155 = scmp.ne.s32.totalorder %s138, %s154
      %p156 = scmp.eq.s32.totalorder %s20, 0
      %p157 = por %p155, %p156
      %p158 = scmp.le.s32.totalorder 1, %s14
      %p159 = scmp.lt.s32.totalorder %s14, 3
      %p160 = pnand %p158, %p159
      %p161 = pneg %p160
      // Predicated region
      $region9: #{tpu_custom_call.1} parent=5 // pred_check
        _
      $region10: #{tpu_custom_call.1} parent=5 // pred_check_branch
        %163 = sbr.rel (%p160) target = $region12
      $region11: #{tpu_custom_call.1} parent=5 // pred_region
        %s164 = ssub.s32 %s14, 1
        // Predicated region
        $region13: #{tpu_custom_call.1} parent=11 // pred_check
          %p165 = pneg %p61
        $region14: #{tpu_custom_call.1} parent=11 // pred_check_branch
          %167 = sbr.rel (%p165) target = $region16
        $region15: #{tpu_custom_call.1} parent=11 // pred_region
          _
        $region16: #{tpu_custom_call.1} parent=11 // pred_fallthru
          _
        // Predicated region
        $region17: #{tpu_custom_call.1} parent=11 // pred_check
          %p168 = pneg %p82
        $region18: #{tpu_custom_call.1} parent=11 // pred_check_branch
          %170 = sbr.rel (%p168) target = $region20
        $region19: #{tpu_custom_call.1} parent=11 // pred_region
          _
        $region20: #{tpu_custom_call.1} parent=11 // pred_fallthru
          _
        // Predicated region
        $region21: #{tpu_custom_call.1} parent=11 // pred_check
          %p171 = pneg %p103
        $region22: #{tpu_custom_call.1} parent=11 // pred_check_branch
          %173 = sbr.rel (%p171) target = $region24
        $region23: #{tpu_custom_call.1} parent=11 // pred_region
          _
        $region24: #{tpu_custom_call.1} parent=11 // pred_fallthru
          _
        // Predicated region
        $region25: #{tpu_custom_call.1} parent=11 // pred_check
          %p174 = pneg %p124
        $region26: #{tpu_custom_call.1} parent=11 // pred_check_branch
          %176 = sbr.rel (%p174) target = $region28
        $region27: #{tpu_custom_call.1} parent=11 // pred_region
          _
        $region28: #{tpu_custom_call.1} parent=11 // pred_fallthru
          _
      $region12: #{tpu_custom_call.1} parent=5 // pred_fallthru
        _
      %p177 = scmp.lt.s32.totalorder %s14, 2
      // Predicated region
      $region29: #{tpu_custom_call.1} parent=5 // pred_check
        %p178 = pneg %p177
      $region30: #{tpu_custom_call.1} parent=5 // pred_check_branch
        %180 = sbr.rel (%p178) target = $region32
      $region31: #{tpu_custom_call.1} parent=5 // pred_region
        // Predicated region
        $region33: #{tpu_custom_call.1} parent=31 // pred_check
          %p181 = pneg %p34
        $region34: #{tpu_custom_call.1} parent=31 // pred_check_branch
          %183 = sbr.rel (%p181) target = $region36
        $region35: #{tpu_custom_call.1} parent=31 // pred_region
          %s184 = smul.u32 16, %s14
          %p185 = scmp.lt.s32.totalorder %s184, 31
          %s186 = scalar_select %p185, %s184, 31
          %s187 = smul.addr %s186, 8
          %s188 = scalar_lea.vmem %s0, %s187
          %s189 = smul.u32 16, %s14
        $region36: #{tpu_custom_call.1} parent=31 // pred_fallthru
          _
      $region32: #{tpu_custom_call.1} parent=5 // pred_fallthru
        _
      %p190 = scmp.le.s32.totalorder 1, %s14
      %p191 = scmp.lt.s32.totalorder %s14, 3
      %p192 = pnand %p190, %p191
      %p193 = pneg %p192
      // Predicated region
      $region37: #{tpu_custom_call.1} parent=5 // pred_check
        _
      $region38: #{tpu_custom_call.1} parent=5 // pred_check_branch
        %195 = sbr.rel (%p192) target = $region40
      $region39: #{tpu_custom_call.1} parent=5 // pred_region
        %s196 = ssub.s32 %s14, 1
        %s197 = smul.u32 16, %s19
        %p198 = scmp.lt.s32.totalorder %s197, 31
        %s199 = scalar_select %p198, %s197, 31
        %s200 = smul.addr %s199, 8
        %s201 = scalar_lea.vmem %s0, %s200
        %p202 = pneg %p40
        %p203 = pneg %p37
        %p204 = pneg %p61
        %p205 = pneg %p58
        %p206 = pneg %p82
        %p207 = pneg %p79
        %p208 = pneg %p103
        %p209 = pneg %p100
        %p210 = pneg %p124
        %p211 = pneg %p121
        %p212 = pneg %p150
        %p213 = pneg %p147
        %s214 = sand.u32 %s137, 1
        %s215 = scalar_lea.sflag [#allocation4], %s214
        %s216 = sand.u32 %s137, 1
        %s217 = smul.addr %s216, 128
        %s218 = scalar_lea.vmem [#allocation3], %s217
        %s219 = smul.u32 16, %s19
        %p220 = scmp.lt.s32.totalorder %s219, 31
        %s221 = scalar_select %p220, %s219, 31
        %s222 = smul.addr %s221, 8
        %s223 = scalar_lea.vmem %s0, %s222
        %s224 = smul.u32 16, %s19
        %s225 = smul.u32 16, %s19
        %v226 = vld [vmem:[%s223] sm:$0xff]
        %v227 = vld [vmem:[%s223 + $0x8] sm:$0xff]
        %v228 = vld [vmem:[%s223 + $0x10] sm:$0xff]
        %v229 = vld [vmem:[%s223 + $0x18] sm:$0xff]
        %v230 = vld [vmem:[%s223 + $0x20] sm:$0xff]
        %v231 = vld [vmem:[%s223 + $0x28] sm:$0xff]
        %v232 = vld [vmem:[%s223 + $0x30] sm:$0xff]
        %v233 = vld [vmem:[%s223 + $0x38] sm:$0xff]
        %v234 = vld [vmem:[%s223 + $0x40] sm:$0xff]
        %v235 = vld [vmem:[%s223 + $0x48] sm:$0xff]
        %v236 = vld [vmem:[%s223 + $0x50] sm:$0xff]
        %v237 = vld [vmem:[%s223 + $0x58] sm:$0xff]
        %v238 = vld [vmem:[%s223 + $0x60] sm:$0xff]
        %v239 = vld [vmem:[%s223 + $0x68] sm:$0xff]
        %v240 = vld [vmem:[%s223 + $0x70] sm:$0xff]
        %v241 = vld [vmem:[%s223 + $0x78] sm:$0xff]
        %v242 = vld [vmem:[%s1] sm:$0xff]
        %v243 = vld [vmem:[%s1 + $0x8] sm:$0xff]
        %v244 = vld [vmem:[%s1 + $0x10] sm:$0xff]
        %v245 = vld [vmem:[%s1 + $0x18] sm:$0xff]
        %v246 = vld [vmem:[%s2] sm:$0x1]
        %v248 = vlaneseq
        %v249 = vshrl.u32 %v248, 7
        %v250 = vsub.s32 0, %v249
        %v251 = vrot.slane %v246, %v250
        %vm253 = vcmask 261120
        %v255 = vsel %vm253, %v226, 0
        %v258 = vsel %vm253, %v227, 0
        %v261 = vsel %vm253, %v228, 0
        %v264 = vsel %vm253, %v229, 0
        %v267 = vsel %vm253, %v230, 0
        %v270 = vsel %vm253, %v231, 0
        %v273 = vsel %vm253, %v232, 0
        %v276 = vsel %vm253, %v233, 0
        %v279 = vsel %vm253, %v234, 0
        %v282 = vsel %vm253, %v235, 0
        %v285 = vsel %vm253, %v236, 0
        %v288 = vsel %vm253, %v237, 0
        %v291 = vsel %vm253, %v238, 0
        %v294 = vsel %vm253, %v239, 0
        %v297 = vsel %vm253, %v240, 0
        %v300 = vsel %vm253, %v241, 0
        %302 = vmatprep.subr.mxu0 0.0
        %303 = vmatpush1.msra.mxu0 0.0
        %304 = vmatprep.subr.mxu0 0.0
        %305 = vmatpush1.msra.mxu0 0.0
        %306 = vmatprep.subr.mxu0 0.0
        %307 = vmatpush1.msra.mxu0 0.0
        %308 = vmatprep.subr.mxu0 0.0
        %309 = vmatpush1.msra.mxu0 0.0
        %310 = vmatprep.subr.mxu0 0.0
        %311 = vmatpush1.msra.mxu0 0.0
        %312 = vmatprep.subr.mxu0 0.0
        %313 = vmatpush1.msra.mxu0 0.0
        %314 = vmatprep.subr.mxu0 0.0
        %315 = vmatpush1.msra.mxu0 0.0
        %316 = vmatprep.subr.mxu0 0.0
        %317 = vmatpush1.msra.mxu0 0.0
        %318 = vmatprep.subr.mxu0 0.0
        %319 = vmatpush1.msra.mxu0 0.0
        %320 = vmatprep.subr.mxu0 0.0
        %321 = vmatpush1.msra.mxu0 0.0
        %322 = vmatprep.subr.mxu0 0.0
        %323 = vmatpush1.msra.mxu0 0.0
        %324 = vmatprep.subr.mxu0 0.0
        %325 = vmatpush1.msra.mxu0 0.0
        %326 = vmatprep.subr.mxu0 0.0
        %327 = vmatpush1.msra.mxu0 %v245
        %328 = vmatprep.subr.mxu0 0.0
        %329 = vmatpush1.msra.mxu0 %v244
        %330 = vmatprep.subr.mxu0 0.0
        %331 = vmatpush1.msra.mxu0 %v243
        %332 = vmatprep.subr.mxu0 0.0
        %333 = vmatpush1.msra.mxu0 %v242
        %334 = vmatprep.subr.mxu0 0.0
        %335 = vmatpush2.msra.mxu0 0.0
        %336 = vmatprep.subr.mxu0 0.0
        %337 = vmatpush2.msra.mxu0 0.0
        %338 = vmatprep.subr.mxu0 0.0
        %339 = vmatpush2.msra.mxu0 0.0
        %340 = vmatprep.subr.mxu0 0.0
        %341 = vmatpush2.msra.mxu0 0.0
        %342 = vmatprep.subr.mxu0 0.0
        %343 = vmatpush2.msra.mxu0 0.0
        %344 = vmatprep.subr.mxu0 0.0
        %345 = vmatpush2.msra.mxu0 0.0
        %346 = vmatprep.subr.mxu0 0.0
        %347 = vmatpush2.msra.mxu0 0.0
        %348 = vmatprep.subr.mxu0 0.0
        %349 = vmatpush2.msra.mxu0 0.0
        %350 = vmatprep.subr.mxu0 0.0
        %351 = vmatpush2.msra.mxu0 0.0
        %352 = vmatprep.subr.mxu0 0.0
        %353 = vmatpush2.msra.mxu0 0.0
        %354 = vmatprep.subr.mxu0 0.0
        %355 = vmatpush2.msra.mxu0 0.0
        %356 = vmatprep.subr.mxu0 0.0
        %357 = vmatpush2.msra.mxu0 0.0
        %358 = vmatprep.subr.mxu0 0.0
        %359 = vmatpush2.msra.mxu0 0.0
        %360 = vmatprep.subr.mxu0 0.0
        %361 = vmatpush2.msra.mxu0 0.0
        %362 = vmatprep.subr.mxu0 0.0
        %363 = vmatpush2.msra.mxu0 0.0
        %364 = vmatprep.subr.mxu0 0.0
        %365 = vmatpush2.msra.mxu0 0.0
        %366 = vmatprep.mubr.f32.mxu0 0.0
        %367 = vmatmul.mubr.f32.gmra.mxu0 %v255
        %v368 = vpop.f32.mrf.mxu0
        %v369 = vadd.f32 %v251, %v368
        %v370 = vpop.f32.mrf.mxu0
        %371 = vmatprep.mubr.f32.mxu0 0.0
        %372 = vmatmul.mubr.f32.gmra.mxu0 %v258
        %v373 = vpop.f32.mrf.mxu0
        %v374 = vadd.f32 %v251, %v373
        %v375 = vpop.f32.mrf.mxu0
        %376 = vmatprep.mubr.f32.mxu0 0.0
        %377 = vmatmul.mubr.f32.gmra.mxu0 %v261
        %v378 = vpop.f32.mrf.mxu0
        %v379 = vadd.f32 %v251, %v378
        %v380 = vpop.f32.mrf.mxu0
        %381 = vmatprep.mubr.f32.mxu0 0.0
        %382 = vmatmul.mubr.f32.gmra.mxu0 %v264
        %v383 = vpop.f32.mrf.mxu0
        %v384 = vadd.f32 %v251, %v383
        %v385 = vpop.f32.mrf.mxu0
        %386 = vmatprep.mubr.f32.mxu0 0.0
        %387 = vmatmul.mubr.f32.gmra.mxu0 %v267
        %v388 = vpop.f32.mrf.mxu0
        %v389 = vadd.f32 %v251, %v388
        %v390 = vpop.f32.mrf.mxu0
        %391 = vmatprep.mubr.f32.mxu0 0.0
        %392 = vmatmul.mubr.f32.gmra.mxu0 %v270
        %v393 = vpop.f32.mrf.mxu0
        %v394 = vadd.f32 %v251, %v393
        %v395 = vpop.f32.mrf.mxu0
        %396 = vmatprep.mubr.f32.mxu0 0.0
        %397 = vmatmul.mubr.f32.gmra.mxu0 %v273
        %v398 = vpop.f32.mrf.mxu0
        %v399 = vadd.f32 %v251, %v398
        %v400 = vpop.f32.mrf.mxu0
        %401 = vmatprep.mubr.f32.mxu0 0.0
        %402 = vmatmul.mubr.f32.gmra.mxu0 %v276
        %v403 = vpop.f32.mrf.mxu0
        %v404 = vadd.f32 %v251, %v403
        %v405 = vpop.f32.mrf.mxu0
        %406 = vmatprep.mubr.f32.mxu0 0.0
        %407 = vmatmul.mubr.f32.gmra.mxu0 %v279
        %v408 = vpop.f32.mrf.mxu0
        %v409 = vadd.f32 %v251, %v408
        %v410 = vpop.f32.mrf.mxu0
        %411 = vmatprep.mubr.f32.mxu0 0.0
        %412 = vmatmul.mubr.f32.gmra.mxu0 %v282
        %v413 = vpop.f32.mrf.mxu0
        %v414 = vadd.f32 %v251, %v413
        %v415 = vpop.f32.mrf.mxu0
        %416 = vmatprep.mubr.f32.mxu0 0.0
        %417 = vmatmul.mubr.f32.gmra.mxu0 %v285
        %v418 = vpop.f32.mrf.mxu0
        %v419 = vadd.f32 %v251, %v418
        %v420 = vpop.f32.mrf.mxu0
        %421 = vmatprep.mubr.f32.mxu0 0.0
        %422 = vmatmul.mubr.f32.gmra.mxu0 %v288
        %v423 = vpop.f32.mrf.mxu0
        %v424 = vadd.f32 %v251, %v423
        %v425 = vpop.f32.mrf.mxu0
        %426 = vmatprep.mubr.f32.mxu0 0.0
        %427 = vmatmul.mubr.f32.gmra.mxu0 %v291
        %v428 = vpop.f32.mrf.mxu0
        %v429 = vadd.f32 %v251, %v428
        %v430 = vpop.f32.mrf.mxu0
        %431 = vmatprep.mubr.f32.mxu0 0.0
        %432 = vmatmul.mubr.f32.gmra.mxu0 %v294
        %v433 = vpop.f32.mrf.mxu0
        %v434 = vadd.f32 %v251, %v433
        %v435 = vpop.f32.mrf.mxu0
        %436 = vmatprep.mubr.f32.mxu0 0.0
        %437 = vmatmul.mubr.f32.gmra.mxu0 %v297
        %v438 = vpop.f32.mrf.mxu0
        %v439 = vadd.f32 %v251, %v438
        %v440 = vpop.f32.mrf.mxu0
        %441 = vmatprep.mubr.f32.mxu0 0.0
        %442 = vmatmul.mubr.f32.gmra.mxu0 %v300
        %v443 = vpop.f32.mrf.mxu0
        %v444 = vadd.f32 %v251, %v443
        %v445 = vpop.f32.mrf.mxu0
        %446 = vdwg.mxu0
        %v447 = vmax.f32 %v369, 0.0
        %v448 = vmax.f32 %v374, 0.0
        %v449 = vmax.f32 %v379, 0.0
        %v450 = vmax.f32 %v384, 0.0
        %v451 = vmax.f32 %v389, 0.0
        %v452 = vmax.f32 %v394, 0.0
        %v453 = vmax.f32 %v399, 0.0
        %v454 = vmax.f32 %v404, 0.0
        %v455 = vmax.f32 %v409, 0.0
        %v456 = vmax.f32 %v414, 0.0
        %v457 = vmax.f32 %v419, 0.0
        %v458 = vmax.f32 %v424, 0.0
        %v459 = vmax.f32 %v429, 0.0
        %v460 = vmax.f32 %v434, 0.0
        %v461 = vmax.f32 %v439, 0.0
        %v462 = vmax.f32 %v444, 0.0
        %463 = vst [vmem:[#allocation2] sm:$0xff] %v447
        %464 = vst [vmem:[#allocation2 + $0x8] sm:$0xff] %v448
        %465 = vst [vmem:[#allocation2 + $0x10] sm:$0xff] %v449
        %466 = vst [vmem:[#allocation2 + $0x18] sm:$0xff] %v450
        %467 = vst [vmem:[#allocation2 + $0x20] sm:$0xff] %v451
        %468 = vst [vmem:[#allocation2 + $0x28] sm:$0xff] %v452
        %469 = vst [vmem:[#allocation2 + $0x30] sm:$0xff] %v453
        %470 = vst [vmem:[#allocation2 + $0x38] sm:$0xff] %v454
        %471 = vst [vmem:[#allocation2 + $0x40] sm:$0xff] %v455
        %472 = vst [vmem:[#allocation2 + $0x48] sm:$0xff] %v456
        %473 = vst [vmem:[#allocation2 + $0x50] sm:$0xff] %v457
        %474 = vst [vmem:[#allocation2 + $0x58] sm:$0xff] %v458
        %475 = vst [vmem:[#allocation2 + $0x60] sm:$0xff] %v459
        %476 = vst [vmem:[#allocation2 + $0x68] sm:$0xff] %v460
        %477 = vst [vmem:[#allocation2 + $0x70] sm:$0xff] %v461
        %478 = vst [vmem:[#allocation2 + $0x78] sm:$0xff] %v462
        %v479 = vld [vmem:[#allocation2] sm:$0xff]
        %v480 = vld [vmem:[#allocation2 + $0x8] sm:$0xff]
        %v481 = vld [vmem:[#allocation2 + $0x10] sm:$0xff]
        %v482 = vld [vmem:[#allocation2 + $0x18] sm:$0xff]
        %v483 = vld [vmem:[#allocation2 + $0x20] sm:$0xff]
        %v484 = vld [vmem:[#allocation2 + $0x28] sm:$0xff]
        %v485 = vld [vmem:[#allocation2 + $0x30] sm:$0xff]
        %v486 = vld [vmem:[#allocation2 + $0x38] sm:$0xff]
        %v487 = vld [vmem:[#allocation2 + $0x40] sm:$0xff]
        %v488 = vld [vmem:[#allocation2 + $0x48] sm:$0xff]
        %v489 = vld [vmem:[#allocation2 + $0x50] sm:$0xff]
        %v490 = vld [vmem:[#allocation2 + $0x58] sm:$0xff]
        %v491 = vld [vmem:[#allocation2 + $0x60] sm:$0xff]
        %v492 = vld [vmem:[#allocation2 + $0x68] sm:$0xff]
        %v493 = vld [vmem:[#allocation2 + $0x70] sm:$0xff]
        %v494 = vld [vmem:[#allocation2 + $0x78] sm:$0xff]
        %v495 = vld [vmem:[%s3] sm:$0xff]
        %v496 = vld [vmem:[%s3 + $0x8] sm:$0xff]
        %v497 = vld [vmem:[%s3 + $0x10] sm:$0xff]
        %v498 = vld [vmem:[%s3 + $0x18] sm:$0xff]
        %v499 = vld [vmem:[%s3 + $0x20] sm:$0xff]
        %v500 = vld [vmem:[%s3 + $0x28] sm:$0xff]
        %v501 = vld [vmem:[%s3 + $0x30] sm:$0xff]
        %v502 = vld [vmem:[%s3 + $0x38] sm:$0xff]
        %v503 = vld [vmem:[%s3 + $0x40] sm:$0xff]
        %v504 = vld [vmem:[%s3 + $0x48] sm:$0xff]
        %v505 = vld [vmem:[%s3 + $0x50] sm:$0xff]
        %v506 = vld [vmem:[%s3 + $0x58] sm:$0xff]
        %v507 = vld [vmem:[%s3 + $0x60] sm:$0xff]
        %v508 = vld [vmem:[%s3 + $0x68] sm:$0xff]
        %v509 = vld [vmem:[%s3 + $0x70] sm:$0xff]
        %v510 = vld [vmem:[%s3 + $0x78] sm:$0xff]
        %v511 = vld [vmem:[%s4] sm:$0x1]
        %v513 = vlaneseq
        %v514 = vshrl.u32 %v513, 7
        %v515 = vsub.s32 0, %v514
        %v516 = vrot.slane %v511, %v515
        %518 = vmatprep.subr.mxu0 0.0
        %519 = vmatpush1.msra.mxu0 %v510
        %520 = vmatprep.subr.mxu0 0.0
        %521 = vmatpush1.msra.mxu0 %v509
        %522 = vmatprep.subr.mxu0 0.0
        %523 = vmatpush1.msra.mxu0 %v508
        %524 = vmatprep.subr.mxu0 0.0
        %525 = vmatpush1.msra.mxu0 %v507
        %526 = vmatprep.subr.mxu0 0.0
        %527 = vmatpush1.msra.mxu0 %v506
        %528 = vmatprep.subr.mxu0 0.0
        %529 = vmatpush1.msra.mxu0 %v505
        %530 = vmatprep.subr.mxu0 0.0
        %531 = vmatpush1.msra.mxu0 %v504
        %532 = vmatprep.subr.mxu0 0.0
        %533 = vmatpush1.msra.mxu0 %v503
        %534 = vmatprep.subr.mxu0 0.0
        %535 = vmatpush1.msra.mxu0 %v502
        %536 = vmatprep.subr.mxu0 0.0
        %537 = vmatpush1.msra.mxu0 %v501
        %538 = vmatprep.subr.mxu0 0.0
        %539 = vmatpush1.msra.mxu0 %v500
        %540 = vmatprep.subr.mxu0 0.0
        %541 = vmatpush1.msra.mxu0 %v499
        %542 = vmatprep.subr.mxu0 0.0
        %543 = vmatpush1.msra.mxu0 %v498
        %544 = vmatprep.subr.mxu0 0.0
        %545 = vmatpush1.msra.mxu0 %v497
        %546 = vmatprep.subr.mxu0 0.0
        %547 = vmatpush1.msra.mxu0 %v496
        %548 = vmatprep.subr.mxu0 0.0
        %549 = vmatpush1.msra.mxu0 %v495
        %550 = vmatprep.subr.mxu0 0.0
        %551 = vmatpush2.msra.mxu0 0.0
        %552 = vmatprep.subr.mxu0 0.0
        %553 = vmatpush2.msra.mxu0 0.0
        %554 = vmatprep.subr.mxu0 0.0
        %555 = vmatpush2.msra.mxu0 0.0
        %556 = vmatprep.subr.mxu0 0.0
        %557 = vmatpush2.msra.mxu0 0.0
        %558 = vmatprep.subr.mxu0 0.0
        %559 = vmatpush2.msra.mxu0 0.0
        %560 = vmatprep.subr.mxu0 0.0
        %561 = vmatpush2.msra.mxu0 0.0
        %562 = vmatprep.subr.mxu0 0.0
        %563 = vmatpush2.msra.mxu0 0.0
        %564 = vmatprep.subr.mxu0 0.0
        %565 = vmatpush2.msra.mxu0 0.0
        %566 = vmatprep.subr.mxu0 0.0
        %567 = vmatpush2.msra.mxu0 0.0
        %568 = vmatprep.subr.mxu0 0.0
        %569 = vmatpush2.msra.mxu0 0.0
        %570 = vmatprep.subr.mxu0 0.0
        %571 = vmatpush2.msra.mxu0 0.0
        %572 = vmatprep.subr.mxu0 0.0
        %573 = vmatpush2.msra.mxu0 0.0
        %574 = vmatprep.subr.mxu0 0.0
        %575 = vmatpush2.msra.mxu0 0.0
        %576 = vmatprep.subr.mxu0 0.0
        %577 = vmatpush2.msra.mxu0 0.0
        %578 = vmatprep.subr.mxu0 0.0
        %579 = vmatpush2.msra.mxu0 0.0
        %580 = vmatprep.subr.mxu0 0.0
        %581 = vmatpush2.msra.mxu0 0.0
        %582 = vmatprep.mubr.f32.mxu0 0.0
        %583 = vmatmul.mubr.f32.gmra.mxu0 %v479
        %v584 = vpop.f32.mrf.mxu0
        %v585 = vadd.f32 %v516, %v584
        %v586 = vpop.f32.mrf.mxu0
        %587 = vmatprep.mubr.f32.mxu0 0.0
        %588 = vmatmul.mubr.f32.gmra.mxu0 %v480
        %v589 = vpop.f32.mrf.mxu0
        %v590 = vadd.f32 %v516, %v589
        %v591 = vpop.f32.mrf.mxu0
        %592 = vmatprep.mubr.f32.mxu0 0.0
        %593 = vmatmul.mubr.f32.gmra.mxu0 %v481
        %v594 = vpop.f32.mrf.mxu0
        %v595 = vadd.f32 %v516, %v594
        %v596 = vpop.f32.mrf.mxu0
        %597 = vmatprep.mubr.f32.mxu0 0.0
        %598 = vmatmul.mubr.f32.gmra.mxu0 %v482
        %v599 = vpop.f32.mrf.mxu0
        %v600 = vadd.f32 %v516, %v599
        %v601 = vpop.f32.mrf.mxu0
        %602 = vmatprep.mubr.f32.mxu0 0.0
        %603 = vmatmul.mubr.f32.gmra.mxu0 %v483
        %v604 = vpop.f32.mrf.mxu0
        %v605 = vadd.f32 %v516, %v604
        %v606 = vpop.f32.mrf.mxu0
        %607 = vmatprep.mubr.f32.mxu0 0.0
        %608 = vmatmul.mubr.f32.gmra.mxu0 %v484
        %v609 = vpop.f32.mrf.mxu0
        %v610 = vadd.f32 %v516, %v609
        %v611 = vpop.f32.mrf.mxu0
        %612 = vmatprep.mubr.f32.mxu0 0.0
        %613 = vmatmul.mubr.f32.gmra.mxu0 %v485
        %v614 = vpop.f32.mrf.mxu0
        %v615 = vadd.f32 %v516, %v614
        %v616 = vpop.f32.mrf.mxu0
        %617 = vmatprep.mubr.f32.mxu0 0.0
        %618 = vmatmul.mubr.f32.gmra.mxu0 %v486
        %v619 = vpop.f32.mrf.mxu0
        %v620 = vadd.f32 %v516, %v619
        %v621 = vpop.f32.mrf.mxu0
        %622 = vmatprep.mubr.f32.mxu0 0.0
        %623 = vmatmul.mubr.f32.gmra.mxu0 %v487
        %v624 = vpop.f32.mrf.mxu0
        %v625 = vadd.f32 %v516, %v624
        %v626 = vpop.f32.mrf.mxu0
        %627 = vmatprep.mubr.f32.mxu0 0.0
        %628 = vmatmul.mubr.f32.gmra.mxu0 %v488
        %v629 = vpop.f32.mrf.mxu0
        %v630 = vadd.f32 %v516, %v629
        %v631 = vpop.f32.mrf.mxu0
        %632 = vmatprep.mubr.f32.mxu0 0.0
        %633 = vmatmul.mubr.f32.gmra.mxu0 %v489
        %v634 = vpop.f32.mrf.mxu0
        %v635 = vadd.f32 %v516, %v634
        %v636 = vpop.f32.mrf.mxu0
        %637 = vmatprep.mubr.f32.mxu0 0.0
        %638 = vmatmul.mubr.f32.gmra.mxu0 %v490
        %v639 = vpop.f32.mrf.mxu0
        %v640 = vadd.f32 %v516, %v639
        %v641 = vpop.f32.mrf.mxu0
        %642 = vmatprep.mubr.f32.mxu0 0.0
        %643 = vmatmul.mubr.f32.gmra.mxu0 %v491
        %v644 = vpop.f32.mrf.mxu0
        %v645 = vadd.f32 %v516, %v644
        %v646 = vpop.f32.mrf.mxu0
        %647 = vmatprep.mubr.f32.mxu0 0.0
        %648 = vmatmul.mubr.f32.gmra.mxu0 %v492
        %v649 = vpop.f32.mrf.mxu0
        %v650 = vadd.f32 %v516, %v649
        %v651 = vpop.f32.mrf.mxu0
        %652 = vmatprep.mubr.f32.mxu0 0.0
        %653 = vmatmul.mubr.f32.gmra.mxu0 %v493
        %v654 = vpop.f32.mrf.mxu0
        %v655 = vadd.f32 %v516, %v654
        %v656 = vpop.f32.mrf.mxu0
        %657 = vmatprep.mubr.f32.mxu0 0.0
        %658 = vmatmul.mubr.f32.gmra.mxu0 %v494
        %v659 = vpop.f32.mrf.mxu0
        %v660 = vadd.f32 %v516, %v659
        %v661 = vpop.f32.mrf.mxu0
        %662 = vdwg.mxu0
        %663 = vst [vmem:[%s218] sm:$0xff] %v585
        %664 = vst [vmem:[%s218 + $0x8] sm:$0xff] %v590
        %665 = vst [vmem:[%s218 + $0x10] sm:$0xff] %v595
        %666 = vst [vmem:[%s218 + $0x18] sm:$0xff] %v600
        %667 = vst [vmem:[%s218 + $0x20] sm:$0xff] %v605
        %668 = vst [vmem:[%s218 + $0x28] sm:$0xff] %v610
        %669 = vst [vmem:[%s218 + $0x30] sm:$0xff] %v615
        %670 = vst [vmem:[%s218 + $0x38] sm:$0xff] %v620
        %671 = vst [vmem:[%s218 + $0x40] sm:$0xff] %v625
        %672 = vst [vmem:[%s218 + $0x48] sm:$0xff] %v630
        %673 = vst [vmem:[%s218 + $0x50] sm:$0xff] %v635
        %674 = vst [vmem:[%s218 + $0x58] sm:$0xff] %v640
        %675 = vst [vmem:[%s218 + $0x60] sm:$0xff] %v645
        %676 = vst [vmem:[%s218 + $0x68] sm:$0xff] %v650
        %677 = vst [vmem:[%s218 + $0x70] sm:$0xff] %v655
        %678 = vst [vmem:[%s218 + $0x78] sm:$0xff] %v660
        %s679 = sand.u32 %s137, 1
        %s680 = scalar_lea.sflag [#allocation4], %s679
        %s681 = sand.u32 %s137, 1
        %s682 = smul.addr %s681, 128
        %s683 = scalar_lea.vmem [#allocation3], %s682
        // Predicated region
        $region41: #{tpu_custom_call.1} parent=39 // pred_check
          %p684 = pneg %p147
        $region42: #{tpu_custom_call.1} parent=39 // pred_check_branch
          %686 = sbr.rel (%p684) target = $region44
        $region43: #{tpu_custom_call.1} parent=39 // pred_region
          %s687 = smul.u32 16, %s19
          %s689 = ssub.s32 2048, 2048
          %690 = vsyncadd %s680, %s689
          %s691 = smul.addr %s687, 128
          %s692 = scalar_lea.hbm %s5, %s691
          %s693 = sshll.u32 %s683, 4
          %s694 = int_to_ptr.vmem [resolvable:$true] %s693
          %699 = dma.vmem_to_hbm [thread:$0]  %s694, 2048, %s692, %s680, 128, 128, 8
        $region44: #{tpu_custom_call.1} parent=39 // pred_fallthru
          _
      $region40: #{tpu_custom_call.1} parent=5 // pred_fallthru
        _
      %p700 = scmp.le.s32.totalorder 2, %s14
      // Predicated region
      $region45: #{tpu_custom_call.1} parent=5 // pred_check
        %p701 = pneg %p700
      $region46: #{tpu_custom_call.1} parent=5 // pred_check_branch
        %703 = sbr.rel (%p701) target = $region48
      $region47: #{tpu_custom_call.1} parent=5 // pred_region
        %s704 = ssub.s32 %s14, 2
        // Predicated region
        $region49: #{tpu_custom_call.1} parent=47 // pred_check
          %p705 = pneg %p153
        $region50: #{tpu_custom_call.1} parent=47 // pred_check_branch
          %707 = sbr.rel (%p705) target = $region52
        $region51: #{tpu_custom_call.1} parent=47 // pred_region
          %s708 = sand.u32 %s138, 1
          %s709 = scalar_lea.sflag [#allocation4], %s708
          %s710 = sand.u32 %s138, 1
          %s711 = smul.addr %s710, 128
          %s712 = scalar_lea.vmem [#allocation3], %s711
          %713 = dma.done %s709, 2048
        $region52: #{tpu_custom_call.1} parent=47 // pred_fallthru
          _
      $region48: #{tpu_custom_call.1} parent=5 // pred_fallthru
        _
    $region6: #{tpu_custom_call.1} parent=1 // loop_footer
      %s18 = sadd.s32 1, %s14
    $region7: #{tpu_custom_call.1} parent=1 // loop_footer_branch
      %13 = sbr.rel target = $region3
    $region8: #{tpu_custom_call.1} parent=1 // loop_exit
      _
    %714 = vsyncpa [#allocation4], 1
    %s715 = scalar_lea.sflag [#allocation4], 1
    %716 = vsyncpa %s715, 1

</llo_original>
